<compile_context>
chip_gen: v6e
topology: v6e:2x2x1
jax: 0.10.0
libtpu: 0.0.40
codegen_flags: <defaults>
</compile_context>

<pallas_src>
import math

import jax
import jax.numpy as jnp
from jax.experimental import pallas as pl
from jax.experimental.pallas import tpu as pltpu


# ----------------------------------------------------------------------------
# Kernel: fused twin-Q MLP on one batch tile. Weights/biases are full-block
# resident (constant index_map); batch tiles stream.
# ----------------------------------------------------------------------------
def _qnet_kernel(
    s_ref,   # (TB, num_inputs)   f32
    a_ref,   # (TB, num_actions)  f32
    w1_ref,  # (D, 2H)            f32 or bf16  (fused heads, rows = [state; action])
    w2_ref,  # (2H, 2H)           block-diagonal (heads stay independent)
    w3_ref,  # (2H, 2)            col 0 = Q1 head, col 1 = Q2 head
    b_ref,   # (3, 2H)            f32: row0 = b1, row1 = b2, row2[:2] = b3
    q_ref,   # (TB, 2)            f32 output: [:, 0] = Q1, [:, 1] = Q2
    xu_ref,  # (TB, D)            f32 VMEM scratch for the concatenated input
):
    ni = s_ref.shape[1]
    na = a_ref.shape[1]
    wdt = w1_ref.dtype

    # Assemble xu = [state | action] in VMEM so layer 1 is a single MXU dot
    # (two sub-slice stores instead of a lowered lane-concat; same effect).
    xu_ref[:, 0:ni] = s_ref[...]
    xu_ref[:, ni:ni + na] = a_ref[...]
    xu = xu_ref[...].astype(wdt)

    b1 = b_ref[0:1, :]        # (1, 2H)
    b2 = b_ref[1:2, :]        # (1, 2H)
    b3 = b_ref[2:3, 0:2]      # (1, 2)

    # Layer 1 (fused heads): one dot over the 8-wide concatenated input.
    h = jnp.dot(xu, w1_ref[...], preferred_element_type=jnp.float32) + b1
    h = jnp.maximum(h, 0.0)

    # Layer 2 (block-diagonal -> heads remain independent).
    h = jnp.dot(h.astype(wdt), w2_ref[...], preferred_element_type=jnp.float32) + b2
    h = jnp.maximum(h, 0.0)

    # Layer 3: single lane-dense (TB, 2) output tile.
    q = jnp.dot(h.astype(wdt), w3_ref[...], preferred_element_type=jnp.float32) + b3
    q_ref[...] = q.astype(q_ref.dtype)


def _round_up(x, m):
    return ((x + m - 1) // m) * m


def _choose_tb(B: int) -> int:
    """Batch tile: 256-aligned (MXU-friendly on v6e/v7x; also a multiple of 128
    for v5e), capped at 1024 (2048 for very large batches), with an even number
    of tiles so v7x's two TensorCores stay balanced."""
    if B <= 512:
        return _round_up(max(B, 1), 8)      # single tile, sublane-aligned
    cap = 2048 if B >= 8192 else 1024
    blocks = -(-B // 256)                   # ceil(B / 256)
    n_tiles = 2
    while -(-blocks // n_tiles) * 256 > cap:
        n_tiles += 2
    return -(-blocks // n_tiles) * 256


# ----------------------------------------------------------------------------
# Wrapper: batch-tiled pallas_call over the fused parameters.
# ----------------------------------------------------------------------------
def qnetwork_forward(state, action, fused_params):
    """Twin-Q forward. state: (B, num_inputs), action: (B, num_actions).

    Returns (q1, q2), each (B, 1) float32 -- identical semantics to the
    PyTorch QNetwork.forward.
    """
    state = state.astype(jnp.float32)
    action = action.astype(jnp.float32)
    B, num_inputs = state.shape
    num_actions = action.shape[1]
    D = num_inputs + num_actions

    w1 = fused_params["w1"]   # (D, 2H)
    w2 = fused_params["w2"]   # (2H, 2H)
    w3 = fused_params["w3"]   # (2H, 2)
    b = fused_params["b"]     # (3, 2H) f32
    H2 = w2.shape[0]          # 2 * hidden_dim

    TB = _choose_tb(B)
    Bp = _round_up(B, TB)
    if Bp != B:
        pad = Bp - B
        # Padded rows produce garbage Q values; they are sliced off below and
        # must be masked if any batch reduction is ever fused into the kernel.
        state = jnp.pad(state, ((0, pad), (0, 0)))
        action = jnp.pad(action, ((0, pad), (0, 0)))
    grid = (Bp // TB,)

    def _resident(arr):
        # Full-block weight/bias spec; same block every grid step so it stays
        # pinned in VMEM while batch tiles stream.
        return pl.BlockSpec(arr.shape, lambda i: (0, 0))

    in_specs = [
        pl.BlockSpec((TB, num_inputs), lambda i: (i, 0)),
        pl.BlockSpec((TB, num_actions), lambda i: (i, 0)),
        _resident(w1), _resident(w2), _resident(w3), _resident(b),
    ]
    out_specs = pl.BlockSpec((TB, 2), lambda i: (i, 0))

    # Advisory cost estimate (kernel is tiny / launch-overhead dominated).
    flops = 2 * Bp * (D * H2 + H2 * H2 + H2 * 2)
    weight_bytes = sum(int(a.size) * a.dtype.itemsize for a in (w1, w2, w3, b))
    bytes_accessed = 4 * (Bp * D + Bp * 2) + weight_bytes
    cost = pl.CostEstimate(
        flops=int(flops), transcendentals=0, bytes_accessed=int(bytes_accessed)
    )

    q = pl.pallas_call(
        _qnet_kernel,
        out_shape=jax.ShapeDtypeStruct((Bp, 2), jnp.float32),
        grid=grid,
        in_specs=in_specs,
        out_specs=out_specs,
        scratch_shapes=[pltpu.VMEM((TB, D), jnp.float32)],
        compiler_params=pltpu.CompilerParams(
            dimension_semantics=("parallel",),
        ),
        cost_estimate=cost,
    )(state, action, w1, w2, w3, b)

    q1 = q[:B, 0:1]
    q2 = q[:B, 1:2]
    return q1, q2


# ----------------------------------------------------------------------------
# Parameter init (xavier_uniform_, gain=1, zero bias -> mirrors weights_init_)
# and packing into the fused layout the kernel consumes.
# ----------------------------------------------------------------------------
def _xavier_uniform(key, fan_in, fan_out):
    limit = math.sqrt(6.0 / (fan_in + fan_out))
    # stored as (in, out) so the kernel computes x @ W
    return jax.random.uniform(
        key, (fan_in, fan_out), dtype=jnp.float32, minval=-limit, maxval=limit
    )


def init_qnetwork_params(key, num_inputs, num_actions, hidden_dim):
    d = num_inputs + num_actions
    keys = jax.random.split(key, 6)
    return {
        "w1": _xavier_uniform(keys[0], d, hidden_dim),
        "b1": jnp.zeros((1, hidden_dim), jnp.float32),
        "w2": _xavier_uniform(keys[1], hidden_dim, hidden_dim),
        "b2": jnp.zeros((1, hidden_dim), jnp.float32),
        "w3": _xavier_uniform(keys[2], hidden_dim, 1),
        "b3": jnp.zeros((1, 1), jnp.float32),
        "w4": _xavier_uniform(keys[3], d, hidden_dim),
        "b4": jnp.zeros((1, hidden_dim), jnp.float32),
        "w5": _xavier_uniform(keys[4], hidden_dim, hidden_dim),
        "b5": jnp.zeros((1, hidden_dim), jnp.float32),
        "w6": _xavier_uniform(keys[5], hidden_dim, 1),
        "b6": jnp.zeros((1, 1), jnp.float32),
    }


def pack_qnetwork_params(p, weights_dtype=jnp.float32):
    """Fuse the twin heads into 3 wide layers (one-time, trace-level packing).

    weights_dtype=jnp.bfloat16 enables the reduced-bandwidth weight path
    (dots still accumulate in f32; biases/ReLU stay f32)."""
    H = p["w1"].shape[1]

    # Layer 1: (D, 2H) -- single fused dot over the in-kernel-assembled xu.
    w1 = jnp.concatenate([p["w1"], p["w4"]], axis=1)                 # (D, 2H)

    # Layer 2: block diagonal -> heads remain independent (cross blocks = 0).
    w2 = jnp.zeros((2 * H, 2 * H), jnp.float32)
    w2 = w2.at[:H, :H].set(p["w2"]).at[H:, H:].set(p["w5"])          # (2H, 2H)

    # Layer 3: column 0 = Q1 head, column 1 = Q2 head.
    w3 = jnp.zeros((2 * H, 2), jnp.float32)
    w3 = w3.at[:H, 0:1].set(p["w3"]).at[H:, 1:2].set(p["w6"])        # (2H, 2)

    # All biases packed into one resident (3, 2H) f32 tensor.
    b1 = jnp.concatenate([p["b1"], p["b4"]], axis=1)                 # (1, 2H)
    b2 = jnp.concatenate([p["b2"], p["b5"]], axis=1)                 # (1, 2H)
    b3 = jnp.concatenate([p["b3"], p["b6"]], axis=1)                 # (1, 2)
    b3p = jnp.zeros((1, 2 * H), jnp.float32).at[:, 0:2].set(b3)
    b = jnp.concatenate([b1, b2, b3p], axis=0)                       # (3, 2H)

    return {
        "w1": w1.astype(weights_dtype),
        "w2": w2.astype(weights_dtype),
        "w3": w3.astype(weights_dtype),
        "b": b,  # always f32
    }


# ----------------------------------------------------------------------------
# Pure-JAX reference (same math as the PyTorch forward), on UNFUSED params.
# ----------------------------------------------------------------------------
def _reference_forward(state, action, p):
    xu = jnp.concatenate([state, action], axis=1)
    h1 = jax.nn.relu(xu @ p["w1"] + p["b1"])
    h1 = jax.nn.relu(h1 @ p["w2"] + p["b2"])
    q1 = h1 @ p["w3"] + p["b3"]
    h2 = jax.nn.relu(xu @ p["w4"] + p["b4"])
    h2 = jax.nn.relu(h2 @ p["w5"] + p["b5"])
    q2 = h2 @ p["w6"] + p["b6"]
    return q1, q2


if __name__ == "__main__":
    num_inputs, num_actions, hidden_dim = 6, 2, 32

    key = jax.random.PRNGKey(0)
    k_params, k_state, k_action, k_state2, k_action2 = jax.random.split(key, 5)

    params = init_qnetwork_params(k_params, num_inputs, num_actions, hidden_dim)
    fused = pack_qnetwork_params(params)                       # f32 (exact) path

    # --- small batch (single tile, grid=1) ---
    batch = 8
    state = jax.random.normal(k_state, (batch, num_inputs), dtype=jnp.float32)
    action = jax.random.normal(k_action, (batch, num_actions), dtype=jnp.float32)

    q1, q2 = qnetwork_forward(state, action, fused)
    jax.block_until_ready((q1, q2))

    r1, r2 = _reference_forward(state, action, params)
    assert q1.shape == (batch, 1) and q2.shape == (batch, 1)
    assert jnp.allclose(q1, r1, atol=1e-5, rtol=1e-5)
    assert jnp.allclose(q2, r2, atol=1e-5, rtol=1e-5)

    # --- larger batch exercising the 256-aligned multi-tile / padding path ---
    batch2 = 528   # -> TB=512, Bp=1024, grid=(2,)
    state2 = jax.random.normal(k_state2, (batch2, num_inputs), dtype=jnp.float32)
    action2 = jax.random.normal(k_action2, (batch2, num_actions), dtype=jnp.float32)

    p1, p2 = qnetwork_forward(state2, action2, fused)
    jax.block_until_ready((p1, p2))
    s1, s2 = _reference_forward(state2, action2, params)
    assert p1.shape == (batch2, 1) and p2.shape == (batch2, 1)
    assert jnp.allclose(p1, s1, atol=1e-5, rtol=1e-5)
    assert jnp.allclose(p2, s2, atol=1e-5, rtol=1e-5)

    # --- optional bf16 weight path (reduced DMA bytes on v6e/v7x) ---
    fused_bf16 = pack_qnetwork_params(params, weights_dtype=jnp.bfloat16)
    b1q, b2q = qnetwork_forward(state, action, fused_bf16)
    jax.block_until_ready((b1q, b2q))
    assert b1q.shape == (batch, 1) and b2q.shape == (batch, 1)
    assert bool(jnp.all(jnp.isfinite(b1q))) and bool(jnp.all(jnp.isfinite(b2q)))

    print("KERNEL_OK")
</pallas_src>

<mosaic_0001>
module attributes {stable_mosaic.version = 11 : i64} {
  func.func @_qnet_kernel(%arg0: i32, %arg1: memref<8x6xf32, #tpu.memory_space<vmem>>, %arg2: memref<8x2xf32, #tpu.memory_space<vmem>>, %arg3: memref<8x64xf32, #tpu.memory_space<vmem>>, %arg4: memref<64x64xf32, #tpu.memory_space<vmem>>, %arg5: memref<64x2xf32, #tpu.memory_space<vmem>>, %arg6: memref<3x64xf32, #tpu.memory_space<vmem>>, %arg7: memref<8x2xf32, #tpu.memory_space<vmem>>, %arg8: memref<8x8xf32, #tpu.memory_space<vmem>>) attributes {dimension_semantics = [#tpu.dimension_semantics<parallel>], iteration_bounds = array<i64: 1>, scalar_prefetch = 0 : i64, scratch_operands = 1 : i64, tpu.core_type = #tpu.core_type<tc>, window_params = [{transform_indices = @transform_0, window_bounds = array<i64: 8, 6>}, {transform_indices = @transform_1, window_bounds = array<i64: 8, 2>}, {pipeline_mode = #tpu.pipeline_mode<synchronous>, transform_indices = @transform_2, window_bounds = array<i64: 8, 64>}, {pipeline_mode = #tpu.pipeline_mode<synchronous>, transform_indices = @transform_3, window_bounds = array<i64: 64, 64>}, {pipeline_mode = #tpu.pipeline_mode<synchronous>, transform_indices = @transform_4, window_bounds = array<i64: 64, 2>}, {pipeline_mode = #tpu.pipeline_mode<synchronous>, transform_indices = @transform_5, window_bounds = array<i64: 3, 64>}, {transform_indices = @transform_6, window_bounds = array<i64: 8, 2>}]} {
    %c0 = arith.constant 0 : index
    %c0_0 = arith.constant 0 : index
    %0 = vector.load %arg1[%c0, %c0_0] : memref<8x6xf32, #tpu.memory_space<vmem>>, vector<8x6xf32>
    %c0_1 = arith.constant 0 : index
    %c0_2 = arith.constant 0 : index
    %1 = vector.load %arg8[%c0_1, %c0_2] : memref<8x8xf32, #tpu.memory_space<vmem>>, vector<8x6xf32>
    tpu.vector_store %arg8[%c0_1, %c0_2], %0 {strides = array<i32>} : memref<8x8xf32, #tpu.memory_space<vmem>>, vector<8x6xf32>,
    %c0_3 = arith.constant 0 : index
    %c0_4 = arith.constant 0 : index
    %2 = vector.load %arg2[%c0_3, %c0_4] : memref<8x2xf32, #tpu.memory_space<vmem>>, vector<8x2xf32>
    %c0_5 = arith.constant 0 : index
    %c6 = arith.constant 6 : index
    %3 = vector.load %arg8[%c0_5, %c6] : memref<8x8xf32, #tpu.memory_space<vmem>>, vector<8x2xf32>
    tpu.vector_store %arg8[%c0_5, %c6], %2 {strides = array<i32>} : memref<8x8xf32, #tpu.memory_space<vmem>>, vector<8x2xf32>,
    %c0_6 = arith.constant 0 : index
    %c0_7 = arith.constant 0 : index
    %4 = vector.load %arg8[%c0_6, %c0_7] : memref<8x8xf32, #tpu.memory_space<vmem>>, vector<8x8xf32>
    %c0_8 = arith.constant 0 : index
    %c0_9 = arith.constant 0 : index
    %5 = vector.load %arg6[%c0_8, %c0_9] : memref<3x64xf32, #tpu.memory_space<vmem>>, vector<1x64xf32>
    %c1 = arith.constant 1 : index
    %c0_10 = arith.constant 0 : index
    %6 = vector.load %arg6[%c1, %c0_10] : memref<3x64xf32, #tpu.memory_space<vmem>>, vector<1x64xf32>
    %c2 = arith.constant 2 : index
    %c0_11 = arith.constant 0 : index
    %7 = vector.load %arg6[%c2, %c0_11] : memref<3x64xf32, #tpu.memory_space<vmem>>, vector<1x2xf32>
    %c0_12 = arith.constant 0 : index
    %c0_13 = arith.constant 0 : index
    %8 = vector.load %arg3[%c0_12, %c0_13] : memref<8x64xf32, #tpu.memory_space<vmem>>, vector<8x64xf32>
    %cst = arith.constant dense<0.000000e+00> : vector<8x64xf32>
    %9 = tpu.matmul %4, %8, %cst {dimension_numbers = #tpu.dot_dimension_numbers<[1], [0], [0], [1], [0, 0, 1, 1], [], []>} : vector<8x8xf32>, vector<8x64xf32>, vector<8x64xf32> -> vector<8x64xf32>
    %10 = vector.broadcast %5 : vector<1x64xf32> to vector<8x64xf32>
    %11 = arith.addf %9, %10 : vector<8x64xf32>
    %cst_14 = arith.constant 0.000000e+00 : f32
    %12 = vector.broadcast %cst_14 : f32 to vector<8x64xf32>
    %13 = arith.maximumf %11, %12 : vector<8x64xf32>
    %c0_15 = arith.constant 0 : index
    %c0_16 = arith.constant 0 : index
    %14 = vector.load %arg4[%c0_15, %c0_16] : memref<64x64xf32, #tpu.memory_space<vmem>>, vector<64x64xf32>
    %cst_17 = arith.constant dense<0.000000e+00> : vector<8x64xf32>
    %15 = tpu.matmul %13, %14, %cst_17 {dimension_numbers = #tpu.dot_dimension_numbers<[1], [0], [0], [1], [0, 0, 1, 1], [], []>} : vector<8x64xf32>, vector<64x64xf32>, vector<8x64xf32> -> vector<8x64xf32>
    %16 = vector.broadcast %6 : vector<1x64xf32> to vector<8x64xf32>
    %17 = arith.addf %15, %16 : vector<8x64xf32>
    %cst_18 = arith.constant 0.000000e+00 : f32
    %18 = vector.broadcast %cst_18 : f32 to vector<8x64xf32>
    %19 = arith.maximumf %17, %18 : vector<8x64xf32>
    %c0_19 = arith.constant 0 : index
    %c0_20 = arith.constant 0 : index
    %20 = vector.load %arg5[%c0_19, %c0_20] : memref<64x2xf32, #tpu.memory_space<vmem>>, vector<64x2xf32>
    %cst_21 = arith.constant dense<0.000000e+00> : vector<8x2xf32>
    %21 = tpu.matmul %19, %20, %cst_21 {dimension_numbers = #tpu.dot_dimension_numbers<[1], [0], [0], [1], [0, 0, 1, 1], [], []>} : vector<8x64xf32>, vector<64x2xf32>, vector<8x2xf32> -> vector<8x2xf32>
    %22 = vector.broadcast %7 : vector<1x2xf32> to vector<8x2xf32>
    %23 = arith.addf %21, %22 : vector<8x2xf32>
    %c0_22 = arith.constant 0 : index
    %c0_23 = arith.constant 0 : index
    %24 = vector.load %arg7[%c0_22, %c0_23] : memref<8x2xf32, #tpu.memory_space<vmem>>, vector<8x2xf32>
    tpu.vector_store %arg7[%c0_22, %c0_23], %23 {strides = array<i32>} : memref<8x2xf32, #tpu.memory_space<vmem>>, vector<8x2xf32>,
    return
  }
  func.func @transform_0(%arg0: i32) -> (i32, i32) {
    %c0_i32 = arith.constant 0 : i32
    %c0_i32_0 = arith.constant 0 : i32
    return %arg0, %c0_i32 : i32, i32
  }
  func.func @transform_1(%arg0: i32) -> (i32, i32) {
    %c0_i32 = arith.constant 0 : i32
    %c0_i32_0 = arith.constant 0 : i32
    return %arg0, %c0_i32 : i32, i32
  }
  func.func @transform_2(%arg0: i32) -> (i32, i32) {
    %c0_i32 = arith.constant 0 : i32
    %c0_i32_0 = arith.constant 0 : i32
    %c0_i32_1 = arith.constant 0 : i32
    return %c0_i32, %c0_i32_0 : i32, i32
  }
  func.func @transform_3(%arg0: i32) -> (i32, i32) {
    %c0_i32 = arith.constant 0 : i32
    %c0_i32_0 = arith.constant 0 : i32
    %c0_i32_1 = arith.constant 0 : i32
    return %c0_i32, %c0_i32_0 : i32, i32
  }
  func.func @transform_4(%arg0: i32) -> (i32, i32) {
    %c0_i32 = arith.constant 0 : i32
    %c0_i32_0 = arith.constant 0 : i32
    %c0_i32_1 = arith.constant 0 : i32
    return %c0_i32, %c0_i32_0 : i32, i32
  }
  func.func @transform_5(%arg0: i32) -> (i32, i32) {
    %c0_i32 = arith.constant 0 : i32
    %c0_i32_0 = arith.constant 0 : i32
    %c0_i32_1 = arith.constant 0 : i32
    return %c0_i32, %c0_i32_0 : i32, i32
  }
  func.func @transform_6(%arg0: i32) -> (i32, i32) {
    %c0_i32 = arith.constant 0 : i32
    %c0_i32_0 = arith.constant 0 : i32
    return %arg0, %c0_i32 : i32, i32
  }
}

</mosaic_0001>

<llo_original>
// kernel: tpu_custom_call.1
$region0: #{tpu_custom_call.1}
  #allocation0 [shape = 'u32[]', space=smem, size = 0x4, offset = 0x4, fixed_abs, tag = 'smem constant byte address 0x4 - core index']
  #allocation1 [shape = 'u32[144,128]{1,0:T(1,128)}', space=vmem, size = 0x12000, scoped, tag = 'internal scratch']
  #allocation2 [shape = 'f32[8,8]{1,0:T(8,128)}', space=vmem, size = 0x1000, scoped, tag = 'scratch operand']
  %s0 = inlined_call_operand.vmem [shape: f32[8,6], index: 0, kind: input, shape index: {}]
  %s1 = inlined_call_operand.vmem [shape: f32[8,2], index: 1, kind: input, shape index: {}]
  %s2 = inlined_call_operand.vmem [shape: f32[8,64], index: 2, kind: input, shape index: {}]
  %s3 = inlined_call_operand.vmem [shape: f32[64,64], index: 3, kind: input, shape index: {}]
  %s4 = inlined_call_operand.vmem [shape: f32[64,2], index: 4, kind: input, shape index: {}]
  %s5 = inlined_call_operand.vmem [shape: f32[3,64], index: 5, kind: input, shape index: {}]
  %s6 = inlined_call_operand.vmem [shape: f32[8,2], index: 6, kind: output, shape index: {}]
  %s7 = sld [smem:[#allocation0]]
  $region34: #{tpu_custom_call.1} parent=0
    _
  %s9 = ssub.s32 1, %s7
  %s10 = scalar_select 0, %s9, %s7
  // Predicated region
  $region2: #{tpu_custom_call.1} parent=0 // pred_check
    _
  $region3: #{tpu_custom_call.1} parent=0 // pred_check_branch
    %12 = sbr.rel (0) target = $region5
  $region4: #{tpu_custom_call.1} parent=0 // pred_region
    _
  $region5: #{tpu_custom_call.1} parent=0 // pred_fallthru
    _
  // Predicated region
  $region6: #{tpu_custom_call.1} parent=0 // pred_check
    _
  $region7: #{tpu_custom_call.1} parent=0 // pred_check_branch
    %14 = sbr.rel (0) target = $region9
  $region8: #{tpu_custom_call.1} parent=0 // pred_region
    _
  $region9: #{tpu_custom_call.1} parent=0 // pred_fallthru
    _
  // Predicated region
  $region10: #{tpu_custom_call.1} parent=0 // pred_check
    _
  $region11: #{tpu_custom_call.1} parent=0 // pred_check_branch
    %16 = sbr.rel (0) target = $region13
  $region12: #{tpu_custom_call.1} parent=0 // pred_region
    _
  $region13: #{tpu_custom_call.1} parent=0 // pred_fallthru
    _
  // Predicated region
  $region14: #{tpu_custom_call.1} parent=0 // pred_check
    _
  $region15: #{tpu_custom_call.1} parent=0 // pred_check_branch
    %18 = sbr.rel (0) target = $region17
  $region16: #{tpu_custom_call.1} parent=0 // pred_region
    _
  $region17: #{tpu_custom_call.1} parent=0 // pred_fallthru
    _
  // Predicated region
  $region18: #{tpu_custom_call.1} parent=0 // pred_check
    _
  $region19: #{tpu_custom_call.1} parent=0 // pred_check_branch
    %20 = sbr.rel (0) target = $region21
  $region20: #{tpu_custom_call.1} parent=0 // pred_region
    _
  $region21: #{tpu_custom_call.1} parent=0 // pred_fallthru
    _
  // Predicated region
  $region22: #{tpu_custom_call.1} parent=0 // pred_check
    _
  $region23: #{tpu_custom_call.1} parent=0 // pred_check_branch
    %22 = sbr.rel (0) target = $region25
  $region24: #{tpu_custom_call.1} parent=0 // pred_region
    _
  $region25: #{tpu_custom_call.1} parent=0 // pred_fallthru
    _
  %v23 = vld [vmem:[%s0] sm:$0xff]
  %vm24 = vcmask 48128
  %25 = vst.msk [vmem:[#allocation2] sm:$0xff] %vm24, %v23
  %v26 = vld [vmem:[%s1] sm:$0xff]
  %28 = vrot.lane.b32.xlu0 %v26, 6
  %v29 = vpop.permute.xlu0 %28
  %vm31 = vcmask 64560
  %32 = vst.msk [vmem:[#allocation2] sm:$0xff] %vm31, %v29
  %v33 = vld [vmem:[#allocation2] sm:$0xff]
  %v34 = vld [vmem:[%s5] sm:$0x1]
  %v35 = vld [vmem:[%s5 + $0x1] sm:$0x1]
  %v36 = vld [vmem:[%s5 + $0x2] sm:$0x1]
  %v37 = vld [vmem:[%s2] sm:$0xff]
  %v38 = vlaneseq
  %v39 = vshrl.u32 %v38, 7
  %v40 = vsub.s32 0, %v39
  %v41 = vrot.slane %v34, %v40
  %vm42 = vcmask 64512
  %v44 = vsel %vm42, %v33, 0
  %46 = vmatprep.subr.mxu0 0.0
  %47 = vmatpush1.msra.mxu0 0.0
  %48 = vmatprep.subr.mxu0 0.0
  %49 = vmatpush1.msra.mxu0 0.0
  %50 = vmatprep.subr.mxu0 0.0
  %51 = vmatpush1.msra.mxu0 0.0
  %52 = vmatprep.subr.mxu0 0.0
  %53 = vmatpush1.msra.mxu0 0.0
  %54 = vmatprep.subr.mxu0 0.0
  %55 = vmatpush1.msra.mxu0 0.0
  %56 = vmatprep.subr.mxu0 0.0
  %57 = vmatpush1.msra.mxu0 0.0
  %58 = vmatprep.subr.mxu0 0.0
  %59 = vmatpush1.msra.mxu0 0.0
  %60 = vmatprep.subr.mxu0 0.0
  %61 = vmatpush1.msra.mxu0 0.0
  %62 = vmatprep.subr.mxu0 0.0
  %63 = vmatpush1.msra.mxu0 0.0
  %64 = vmatprep.subr.mxu0 0.0
  %65 = vmatpush1.msra.mxu0 0.0
  %66 = vmatprep.subr.mxu0 0.0
  %67 = vmatpush1.msra.mxu0 0.0
  %68 = vmatprep.subr.mxu0 0.0
  %69 = vmatpush1.msra.mxu0 0.0
  %70 = vmatprep.subr.mxu0 0.0
  %71 = vmatpush1.msra.mxu0 0.0
  %72 = vmatprep.subr.mxu0 0.0
  %73 = vmatpush1.msra.mxu0 0.0
  %74 = vmatprep.subr.mxu0 0.0
  %75 = vmatpush1.msra.mxu0 0.0
  %76 = vmatprep.subr.mxu0 0.0
  %77 = vmatpush1.msra.mxu0 %v37
  %78 = vmatprep.subr.mxu0 0.0
  %79 = vmatpush2.msra.mxu0 0.0
  %80 = vmatprep.subr.mxu0 0.0
  %81 = vmatpush2.msra.mxu0 0.0
  %82 = vmatprep.subr.mxu0 0.0
  %83 = vmatpush2.msra.mxu0 0.0
  %84 = vmatprep.subr.mxu0 0.0
  %85 = vmatpush2.msra.mxu0 0.0
  %86 = vmatprep.subr.mxu0 0.0
  %87 = vmatpush2.msra.mxu0 0.0
  %88 = vmatprep.subr.mxu0 0.0
  %89 = vmatpush2.msra.mxu0 0.0
  %90 = vmatprep.subr.mxu0 0.0
  %91 = vmatpush2.msra.mxu0 0.0
  %92 = vmatprep.subr.mxu0 0.0
  %93 = vmatpush2.msra.mxu0 0.0
  %94 = vmatprep.subr.mxu0 0.0
  %95 = vmatpush2.msra.mxu0 0.0
  %96 = vmatprep.subr.mxu0 0.0
  %97 = vmatpush2.msra.mxu0 0.0
  %98 = vmatprep.subr.mxu0 0.0
  %99 = vmatpush2.msra.mxu0 0.0
  %100 = vmatprep.subr.mxu0 0.0
  %101 = vmatpush2.msra.mxu0 0.0
  %102 = vmatprep.subr.mxu0 0.0
  %103 = vmatpush2.msra.mxu0 0.0
  %104 = vmatprep.subr.mxu0 0.0
  %105 = vmatpush2.msra.mxu0 0.0
  %106 = vmatprep.subr.mxu0 0.0
  %107 = vmatpush2.msra.mxu0 0.0
  %108 = vmatprep.subr.mxu0 0.0
  %109 = vmatpush2.msra.mxu0 0.0
  %110 = vmatprep.mubr.f32.mxu0 0.0
  %111 = vmatmul.mubr.f32.gmra.mxu0 %v44
  %v112 = vpop.f32.mrf.mxu0
  %v113 = vadd.f32 %v41, %v112
  %v114 = vpop.f32.mrf.mxu0
  %115 = vdwg.mxu0
  %v116 = vmax.f32 %v113, 0.0
  %v117 = vld [vmem:[%s3] sm:$0xff]
  %v118 = vld [vmem:[%s3 + $0x8] sm:$0xff]
  %v119 = vld [vmem:[%s3 + $0x10] sm:$0xff]
  %v120 = vld [vmem:[%s3 + $0x18] sm:$0xff]
  %v121 = vld [vmem:[%s3 + $0x20] sm:$0xff]
  %v122 = vld [vmem:[%s3 + $0x28] sm:$0xff]
  %v123 = vld [vmem:[%s3 + $0x30] sm:$0xff]
  %v124 = vld [vmem:[%s3 + $0x38] sm:$0xff]
  %v125 = vlaneseq
  %v126 = vshrl.u32 %v125, 7
  %v127 = vsub.s32 0, %v126
  %v128 = vrot.slane %v35, %v127
  %vm129 = vcmask 523264
  %v131 = vsel %vm129, %v116, 0
  %133 = vmatprep.subr.mxu0 0.0
  %134 = vmatpush1.msra.mxu0 0.0
  %135 = vmatprep.subr.mxu0 0.0
  %136 = vmatpush1.msra.mxu0 0.0
  %137 = vmatprep.subr.mxu0 0.0
  %138 = vmatpush1.msra.mxu0 0.0
  %139 = vmatprep.subr.mxu0 0.0
  %140 = vmatpush1.msra.mxu0 0.0
  %141 = vmatprep.subr.mxu0 0.0
  %142 = vmatpush1.msra.mxu0 0.0
  %143 = vmatprep.subr.mxu0 0.0
  %144 = vmatpush1.msra.mxu0 0.0
  %145 = vmatprep.subr.mxu0 0.0
  %146 = vmatpush1.msra.mxu0 0.0
  %147 = vmatprep.subr.mxu0 0.0
  %148 = vmatpush1.msra.mxu0 0.0
  %149 = vmatprep.subr.mxu0 0.0
  %150 = vmatpush1.msra.mxu0 %v124
  %151 = vmatprep.subr.mxu0 0.0
  %152 = vmatpush1.msra.mxu0 %v123
  %153 = vmatprep.subr.mxu0 0.0
  %154 = vmatpush1.msra.mxu0 %v122
  %155 = vmatprep.subr.mxu0 0.0
  %156 = vmatpush1.msra.mxu0 %v121
  %157 = vmatprep.subr.mxu0 0.0
  %158 = vmatpush1.msra.mxu0 %v120
  %159 = vmatprep.subr.mxu0 0.0
  %160 = vmatpush1.msra.mxu0 %v119
  %161 = vmatprep.subr.mxu0 0.0
  %162 = vmatpush1.msra.mxu0 %v118
  %163 = vmatprep.subr.mxu0 0.0
  %164 = vmatpush1.msra.mxu0 %v117
  %165 = vmatprep.subr.mxu0 0.0
  %166 = vmatpush2.msra.mxu0 0.0
  %167 = vmatprep.subr.mxu0 0.0
  %168 = vmatpush2.msra.mxu0 0.0
  %169 = vmatprep.subr.mxu0 0.0
  %170 = vmatpush2.msra.mxu0 0.0
  %171 = vmatprep.subr.mxu0 0.0
  %172 = vmatpush2.msra.mxu0 0.0
  %173 = vmatprep.subr.mxu0 0.0
  %174 = vmatpush2.msra.mxu0 0.0
  %175 = vmatprep.subr.mxu0 0.0
  %176 = vmatpush2.msra.mxu0 0.0
  %177 = vmatprep.subr.mxu0 0.0
  %178 = vmatpush2.msra.mxu0 0.0
  %179 = vmatprep.subr.mxu0 0.0
  %180 = vmatpush2.msra.mxu0 0.0
  %181 = vmatprep.subr.mxu0 0.0
  %182 = vmatpush2.msra.mxu0 0.0
  %183 = vmatprep.subr.mxu0 0.0
  %184 = vmatpush2.msra.mxu0 0.0
  %185 = vmatprep.subr.mxu0 0.0
  %186 = vmatpush2.msra.mxu0 0.0
  %187 = vmatprep.subr.mxu0 0.0
  %188 = vmatpush2.msra.mxu0 0.0
  %189 = vmatprep.subr.mxu0 0.0
  %190 = vmatpush2.msra.mxu0 0.0
  %191 = vmatprep.subr.mxu0 0.0
  %192 = vmatpush2.msra.mxu0 0.0
  %193 = vmatprep.subr.mxu0 0.0
  %194 = vmatpush2.msra.mxu0 0.0
  %195 = vmatprep.subr.mxu0 0.0
  %196 = vmatpush2.msra.mxu0 0.0
  %197 = vmatprep.mubr.f32.mxu0 0.0
  %198 = vmatmul.mubr.f32.gmra.mxu0 %v131
  %v199 = vpop.f32.mrf.mxu0
  %v200 = vadd.f32 %v128, %v199
  %v201 = vpop.f32.mrf.mxu0
  %202 = vdwg.mxu0
  %v203 = vmax.f32 %v200, 0.0
  %v204 = vld [vmem:[%s4] sm:$0xff]
  %v205 = vld [vmem:[%s4 + $0x8] sm:$0xff]
  %v206 = vld [vmem:[%s4 + $0x10] sm:$0xff]
  %v207 = vld [vmem:[%s4 + $0x18] sm:$0xff]
  %v208 = vld [vmem:[%s4 + $0x20] sm:$0xff]
  %v209 = vld [vmem:[%s4 + $0x28] sm:$0xff]
  %v210 = vld [vmem:[%s4 + $0x30] sm:$0xff]
  %v211 = vld [vmem:[%s4 + $0x38] sm:$0xff]
  %v212 = vlaneseq
  %v213 = vshrl.u32 %v212, 7
  %v214 = vsub.s32 0, %v213
  %v215 = vrot.slane %v36, %v214
  %v217 = vsel %vm129, %v203, 0
  %219 = vmatprep.subr.mxu0 0.0
  %220 = vmatpush1.msra.mxu0 0.0
  %221 = vmatprep.subr.mxu0 0.0
  %222 = vmatpush1.msra.mxu0 0.0
  %223 = vmatprep.subr.mxu0 0.0
  %224 = vmatpush1.msra.mxu0 0.0
  %225 = vmatprep.subr.mxu0 0.0
  %226 = vmatpush1.msra.mxu0 0.0
  %227 = vmatprep.subr.mxu0 0.0
  %228 = vmatpush1.msra.mxu0 0.0
  %229 = vmatprep.subr.mxu0 0.0
  %230 = vmatpush1.msra.mxu0 0.0
  %231 = vmatprep.subr.mxu0 0.0
  %232 = vmatpush1.msra.mxu0 0.0
  %233 = vmatprep.subr.mxu0 0.0
  %234 = vmatpush1.msra.mxu0 0.0
  %235 = vmatprep.subr.mxu0 0.0
  %236 = vmatpush1.msra.mxu0 %v211
  %237 = vmatprep.subr.mxu0 0.0
  %238 = vmatpush1.msra.mxu0 %v210
  %239 = vmatprep.subr.mxu0 0.0
  %240 = vmatpush1.msra.mxu0 %v209
  %241 = vmatprep.subr.mxu0 0.0
  %242 = vmatpush1.msra.mxu0 %v208
  %243 = vmatprep.subr.mxu0 0.0
  %244 = vmatpush1.msra.mxu0 %v207
  %245 = vmatprep.subr.mxu0 0.0
  %246 = vmatpush1.msra.mxu0 %v206
  %247 = vmatprep.subr.mxu0 0.0
  %248 = vmatpush1.msra.mxu0 %v205
  %249 = vmatprep.subr.mxu0 0.0
  %250 = vmatpush1.msra.mxu0 %v204
  %251 = vmatprep.subr.mxu0 0.0
  %252 = vmatpush2.msra.mxu0 0.0
  %253 = vmatprep.subr.mxu0 0.0
  %254 = vmatpush2.msra.mxu0 0.0
  %255 = vmatprep.subr.mxu0 0.0
  %256 = vmatpush2.msra.mxu0 0.0
  %257 = vmatprep.subr.mxu0 0.0
  %258 = vmatpush2.msra.mxu0 0.0
  %259 = vmatprep.subr.mxu0 0.0
  %260 = vmatpush2.msra.mxu0 0.0
  %261 = vmatprep.subr.mxu0 0.0
  %262 = vmatpush2.msra.mxu0 0.0
  %263 = vmatprep.subr.mxu0 0.0
  %264 = vmatpush2.msra.mxu0 0.0
  %265 = vmatprep.subr.mxu0 0.0
  %266 = vmatpush2.msra.mxu0 0.0
  %267 = vmatprep.subr.mxu0 0.0
  %268 = vmatpush2.msra.mxu0 0.0
  %269 = vmatprep.subr.mxu0 0.0
  %270 = vmatpush2.msra.mxu0 0.0
  %271 = vmatprep.subr.mxu0 0.0
  %272 = vmatpush2.msra.mxu0 0.0
  %273 = vmatprep.subr.mxu0 0.0
  %274 = vmatpush2.msra.mxu0 0.0
  %275 = vmatprep.subr.mxu0 0.0
  %276 = vmatpush2.msra.mxu0 0.0
  %277 = vmatprep.subr.mxu0 0.0
  %278 = vmatpush2.msra.mxu0 0.0
  %279 = vmatprep.subr.mxu0 0.0
  %280 = vmatpush2.msra.mxu0 0.0
  %281 = vmatprep.subr.mxu0 0.0
  %282 = vmatpush2.msra.mxu0 0.0
  %283 = vmatprep.mubr.f32.mxu0 0.0
  %284 = vmatmul.mubr.f32.gmra.mxu0 %v217
  %v285 = vpop.f32.mrf.mxu0
  %v286 = vadd.f32 %v215, %v285
  %v287 = vpop.f32.mrf.mxu0
  %288 = vdwg.mxu0
  %vm289 = vcmask 15360
  %290 = vst.msk [vmem:[%s6] sm:$0xff] %vm289, %v286
  // Predicated region
  $region26: #{tpu_custom_call.1} parent=0 // pred_check
    _
  $region27: #{tpu_custom_call.1} parent=0 // pred_check_branch
    %292 = sbr.rel (0) target = $region29
  $region28: #{tpu_custom_call.1} parent=0 // pred_region
    _
  $region29: #{tpu_custom_call.1} parent=0 // pred_fallthru
    _
  // Predicated region
  $region30: #{tpu_custom_call.1} parent=0 // pred_check
    _
  $region31: #{tpu_custom_call.1} parent=0 // pred_check_branch
    %294 = sbr.rel (0) target = $region33
  $region32: #{tpu_custom_call.1} parent=0 // pred_region
    _
  $region33: #{tpu_custom_call.1} parent=0 // pred_fallthru
    _

</llo_original>
